<compile_context>
chip_gen: v7x
topology: tpu7x:2x2x1
jax: 0.10.0
libtpu: 0.0.40
codegen_flags: <defaults>
</compile_context>

<pallas_src>
import math
import functools

import jax
import jax.numpy as jnp
from jax.experimental import pallas as pl
from jax.experimental.pallas import tpu as pltpu


# ---------------------------------------------------------------------------
# TF-same padding (same math as calc_tf_padding in the PyTorch module)
# ---------------------------------------------------------------------------
def calc_tf_padding(height, width, kernel_size=3, stride=2, dilation=1):
    oh = math.ceil(height / stride)
    ow = math.ceil(width / stride)
    pad_h = max((oh - 1) * stride + (kernel_size - 1) * dilation + 1 - height, 0)
    pad_w = max((ow - 1) * stride + (kernel_size - 1) * dilation + 1 - width, 0)
    return (pad_h // 2, pad_h - pad_h // 2, pad_w // 2, pad_w - pad_w // 2)


# ---------------------------------------------------------------------------
# Pallas kernel: fused (conv-as-matmul) + folded BatchNorm bias + ReLU
#   pT_ref : (1, K, tm)    bf16  transposed im2col tile (lanes = output pixels)
#   w_ref  : (Cout, K)     bf16  conv weights with BN scale folded in
#   b_ref  : (Cout, 1)     f32   folded BN bias
#   o_ref  : (1, Cout, tm) f32   lane-dense output tile
# ---------------------------------------------------------------------------
def _fused_conv_bn_relu_kernel(pT_ref, w_ref, b_ref, o_ref):
    acc = jnp.dot(w_ref[...], pT_ref[0], preferred_element_type=jnp.float32)
    o_ref[0] = jnp.maximum(acc + b_ref[...], 0.0).astype(o_ref.dtype)


# ---------------------------------------------------------------------------
# Wrapper: EffiInitBlock forward
# ---------------------------------------------------------------------------
def effi_init_block_forward(x_nchw, weight, gamma, beta, run_mean, run_var,
                            bn_eps=1e-5, tf_mode=True, tm=2048):
    B, Cin, H, W = x_nchw.shape
    Cout = weight.shape[0]
    KS, stride = 3, 2

    # --- padding (replicates the F.pad quirk: first pad pair -> W, second -> H)
    if tf_mode:
        p0, p1, p2, p3 = calc_tf_padding(H, W, KS, stride)
        pad_h, pad_w = (p2, p3), (p0, p1)
    else:
        pad_h, pad_w = (1, 1), (1, 1)
    x_pad = jnp.pad(x_nchw, ((0, 0), (0, 0), pad_h, pad_w))

    Hp, Wp = x_pad.shape[2], x_pad.shape[3]
    Ho = (Hp - KS) // stride + 1
    Wo = (Wp - KS) // stride + 1
    K = KS * KS * Cin
    Mb = Ho * Wo                       # output pixels per batch element

    # --- transposed im2col, bf16, per batch:  pT[b, (kh,kw,c), (oh,ow)] ------
    taps = [x_pad[:, :, kh:kh + stride * Ho:stride, kw:kw + stride * Wo:stride]
            for kh in range(KS) for kw in range(KS)]        # each (B,Cin,Ho,Wo)
    pT = jnp.stack(taps, axis=1).reshape(B, K, Mb).astype(jnp.bfloat16)

    # --- fold BatchNorm (eval mode) into weights / bias ----------------------
    scale = gamma / jnp.sqrt(run_var + bn_eps)                      # (Cout,)
    wf = jnp.transpose(weight, (0, 2, 3, 1)).reshape(Cout, K)       # (kh,kw,c)
    wf = (wf * scale[:, None]).astype(jnp.bfloat16)                 # scale folded
    bias = (beta - run_mean * scale).reshape(Cout, 1).astype(jnp.float32)

    # --- pixel-tile size (lane axis).  Sweep 1024-4096 per chip generation. --
    if Mb <= tm:
        tm_eff = Mb                                  # full dim -> always legal
    else:
        tm_eff = max(128, (tm // 128) * 128)         # keep lane tile 128-aligned
    n_m = pl.cdiv(Mb, tm_eff)                        # uneven tail is masked

    out = pl.pallas_call(
        _fused_conv_bn_relu_kernel,
        out_shape=jax.ShapeDtypeStruct((B, Cout, Mb), jnp.float32),
        grid=(B, n_m),
        in_specs=[
            pl.BlockSpec((1, K, tm_eff), lambda b, i: (b, 0, i)),
            pl.BlockSpec((Cout, K), lambda b, i: (0, 0)),
            pl.BlockSpec((Cout, 1), lambda b, i: (0, 0)),
        ],
        out_specs=pl.BlockSpec((1, Cout, tm_eff), lambda b, i: (b, 0, i)),
        compiler_params=pltpu.CompilerParams(
            dimension_semantics=("parallel", "parallel")),
    )(pT, wf, bias)

    # --- free reshape back to NCHW (no transpose needed) ---------------------
    return out.reshape(B, Cout, Ho, Wo)


# ---------------------------------------------------------------------------
# Pure-JAX f32 reference (for a sanity check)
# ---------------------------------------------------------------------------
def _reference(x_nchw, weight, gamma, beta, run_mean, run_var, bn_eps, tf_mode):
    B, Cin, H, W = x_nchw.shape
    x = jnp.transpose(x_nchw, (0, 2, 3, 1))
    if tf_mode:
        p0, p1, p2, p3 = calc_tf_padding(H, W, 3, 2)
        x = jnp.pad(x, ((0, 0), (p2, p3), (p0, p1), (0, 0)))
    else:
        x = jnp.pad(x, ((0, 0), (1, 1), (1, 1), (0, 0)))
    w_hwio = jnp.transpose(weight, (2, 3, 1, 0))
    y = jax.lax.conv_general_dilated(
        x, w_hwio, window_strides=(2, 2), padding="VALID",
        dimension_numbers=("NHWC", "HWIO", "NHWC"),
        precision=jax.lax.Precision.HIGHEST)
    scale = gamma / jnp.sqrt(run_var + bn_eps)
    bias = beta - run_mean * scale
    y = y * scale.reshape(1, 1, 1, -1) + bias.reshape(1, 1, 1, -1)
    y = jnp.maximum(y, 0.0)
    return jnp.transpose(y, (0, 3, 1, 2))


if __name__ == "__main__":
    B, Cin, H, W = 2, 3, 16, 16
    Cout = 32
    bn_eps = 1e-5
    tf_mode = True

    key = jax.random.PRNGKey(0)
    kx, kw, kg, kb, km, kv = jax.random.split(key, 6)
    x = jax.random.normal(kx, (B, Cin, H, W), dtype=jnp.float32)
    weight = jax.random.normal(kw, (Cout, Cin, 3, 3), dtype=jnp.float32) * 0.1
    gamma = 1.0 + 0.1 * jax.random.normal(kg, (Cout,), dtype=jnp.float32)
    beta = 0.1 * jax.random.normal(kb, (Cout,), dtype=jnp.float32)
    run_mean = 0.1 * jax.random.normal(km, (Cout,), dtype=jnp.float32)
    run_var = jnp.abs(jax.random.normal(kv, (Cout,), dtype=jnp.float32)) + 0.5

    fwd = jax.jit(functools.partial(effi_init_block_forward,
                                    bn_eps=bn_eps, tf_mode=tf_mode))
    out = jax.block_until_ready(fwd(x, weight, gamma, beta, run_mean, run_var))

    ref = jax.block_until_ready(
        _reference(x, weight, gamma, beta, run_mean, run_var, bn_eps, tf_mode))

    assert out.shape == (B, Cout, H // 2, W // 2), out.shape
    max_diff = float(jnp.max(jnp.abs(out - ref)))
    # bf16 matmul operands with f32 accumulation vs an all-f32 reference.
    assert max_diff < 3e-2, f"max diff too large: {max_diff}"
    print("KERNEL_OK")
</pallas_src>

<mosaic_0001>
module attributes {stable_mosaic.version = 11 : i64} {
  func.func @_fused_conv_bn_relu_kernel(%arg0: i32, %arg1: i32, %arg2: memref<1x27x64xbf16, #tpu.memory_space<vmem>>, %arg3: memref<32x27xbf16, #tpu.memory_space<vmem>>, %arg4: memref<32x1xf32, #tpu.memory_space<vmem>>, %arg5: memref<1x32x64xf32, #tpu.memory_space<vmem>>) attributes {dimension_semantics = [#tpu.dimension_semantics<parallel>, #tpu.dimension_semantics<parallel>], iteration_bounds = array<i64: 2, 1>, scalar_prefetch = 0 : i64, scratch_operands = 0 : i64, tpu.core_type = #tpu.core_type<tc>, window_params = [{transform_indices = @transform_0, window_bounds = array<i64: 1, 27, 64>}, {pipeline_mode = #tpu.pipeline_mode<synchronous>, transform_indices = @transform_1, window_bounds = array<i64: 32, 27>}, {pipeline_mode = #tpu.pipeline_mode<synchronous>, transform_indices = @transform_2, window_bounds = array<i64: 32, 1>}, {transform_indices = @transform_3, window_bounds = array<i64: 1, 32, 64>}]} {
    %c0 = arith.constant 0 : index
    %c0_0 = arith.constant 0 : index
    %0 = vector.load %arg3[%c0, %c0_0] : memref<32x27xbf16, #tpu.memory_space<vmem>>, vector<32x27xbf16>
    %c0_1 = arith.constant 0 : index
    %c0_2 = arith.constant 0 : index
    %c0_3 = arith.constant 0 : index
    %1 = vector.load %arg2[%c0_1, %c0_2, %c0_3] : memref<1x27x64xbf16, #tpu.memory_space<vmem>>, vector<1x27x64xbf16>
    %2 = vector.shape_cast %1 : vector<1x27x64xbf16> to vector<27x64xbf16>
    %cst = arith.constant dense<0.000000e+00> : vector<32x64xf32>
    %3 = tpu.matmul %0, %2, %cst {dimension_numbers = #tpu.dot_dimension_numbers<[1], [0], [0], [1], [0, 0, 1, 1], [], []>} : vector<32x27xbf16>, vector<27x64xbf16>, vector<32x64xf32> -> vector<32x64xf32>
    %c0_4 = arith.constant 0 : index
    %c0_5 = arith.constant 0 : index
    %4 = vector.load %arg4[%c0_4, %c0_5] : memref<32x1xf32, #tpu.memory_space<vmem>>, vector<32x1xf32>
    %5 = vector.broadcast %4 : vector<32x1xf32> to vector<32x64xf32>
    %6 = arith.addf %3, %5 : vector<32x64xf32>
    %cst_6 = arith.constant 0.000000e+00 : f32
    %7 = vector.broadcast %cst_6 : f32 to vector<32x64xf32>
    %8 = arith.maximumf %6, %7 : vector<32x64xf32>
    %c0_7 = arith.constant 0 : index
    %c0_8 = arith.constant 0 : index
    %c0_9 = arith.constant 0 : index
    %9 = vector.load %arg5[%c0_7, %c0_8, %c0_9] : memref<1x32x64xf32, #tpu.memory_space<vmem>>, vector<1x32x64xf32>
    %10 = vector.shape_cast %9 : vector<1x32x64xf32> to vector<32x64xf32>
    %11 = vector.shape_cast %8 : vector<32x64xf32> to vector<1x32x64xf32>
    tpu.vector_store %arg5[%c0_7, %c0_8, %c0_9], %11 {strides = array<i32>} : memref<1x32x64xf32, #tpu.memory_space<vmem>>, vector<1x32x64xf32>,
    return
  }
  func.func @transform_0(%arg0: i32, %arg1: i32) -> (i32, i32, i32) {
    %c0_i32 = arith.constant 0 : i32
    %c0_i32_0 = arith.constant 0 : i32
    return %arg0, %c0_i32, %arg1 : i32, i32, i32
  }
  func.func @transform_1(%arg0: i32, %arg1: i32) -> (i32, i32) {
    %c0_i32 = arith.constant 0 : i32
    %c0_i32_0 = arith.constant 0 : i32
    %c0_i32_1 = arith.constant 0 : i32
    return %c0_i32, %c0_i32_0 : i32, i32
  }
  func.func @transform_2(%arg0: i32, %arg1: i32) -> (i32, i32) {
    %c0_i32 = arith.constant 0 : i32
    %c0_i32_0 = arith.constant 0 : i32
    %c0_i32_1 = arith.constant 0 : i32
    return %c0_i32, %c0_i32_0 : i32, i32
  }
  func.func @transform_3(%arg0: i32, %arg1: i32) -> (i32, i32, i32) {
    %c0_i32 = arith.constant 0 : i32
    %c0_i32_0 = arith.constant 0 : i32
    return %arg0, %c0_i32, %arg1 : i32, i32, i32
  }
}

</mosaic_0001>

<llo_original>
// kernel: effi_init_block_forward.1
$region0: #{effi_init_block_forward.1}
  #allocation0 [shape = 'u32[]', space=smem, size = 0x4, offset = 0x4, fixed_abs, tag = 'smem constant byte address 0x4 - core index']
  #allocation1 [shape = 'u32[144,128]{1,0:T(1,128)}', space=vmem, size = 0x12000, scoped, tag = 'internal scratch']
  %s0 = inlined_call_operand.vmem [shape: bf16[2,27,64], index: 0, kind: input, shape index: {}]
  %s1 = inlined_call_operand.vmem [shape: bf16[32,27], index: 1, kind: input, shape index: {}]
  %s2 = inlined_call_operand.vmem [shape: f32[32,1], index: 2, kind: input, shape index: {}]
  %s3 = inlined_call_operand.vmem [shape: f32[2,32,64], index: 3, kind: output, shape index: {}]
  %s4 = sld [smem:[#allocation0]]
  $region45: #{effi_init_block_forward.1} parent=0
    _
  %s6 = ssub.s32 1, %s4
  %s7 = scalar_select 0, %s6, %s4
  loop: start=0, step=1, limit=4
  $region2: #{effi_init_block_forward.1} parent=0 // loop_pre_header
    _
  $region3: #{effi_init_block_forward.1} parent=0 // loop_header
    %s9 = sphi 0, %s13
    %p10 = scmp.ge.s32.totalorder %s9, 4
    %s16 = sphi 0, %s28
    %s17 = sphi 0, %s24
    %s18 = sphi 0, %s16
    %s19 = sphi 0, %s17
    %s20 = sphi 0, %s18
    %s21 = sphi 0, %s19
    %s33 = sphi 0, %s35
    %s36 = sphi 0, %s33
    %s37 = sphi 0, %s36
    %s53 = sphi 0, %s37
    %s57 = sphi 0, %s57
    %s59 = sphi 0, %s57
    %s60 = sphi 0, %s59
    %s74 = sphi 0, %s60
    %s78 = sphi 0, %s78
    %s80 = sphi 0, %s78
    %s81 = sphi 0, %s80
    %s95 = sphi 0, %s81
    %s103 = sphi 0, %s105
    %s106 = sphi 0, %s103
    %s107 = sphi 0, %s106
    %s123 = sphi 0, %s107
  $region4: #{effi_init_block_forward.1} parent=0 // loop_header_branch
    %12 = sbr.rel (%p10) target = $region8
  $region5: #{effi_init_block_forward.1} parent=0 // loop_body
    %s14 = ssub.s32 %s9, 1
    %s15 = ssub.s32 %s9, 2
    %s22 = sadd.s32 1, %s17
    %p23 = scmp.ge.s32.totalorder %s22, 1
    %s24 = scalar_select %p23, 0, %s22
    %s25 = sadd.s32 1, %s16
    %s26 = scalar_select %p23, %s25, %s16
    %p27 = scmp.ge.s32.totalorder %s26, 2
    %s28 = scalar_select %p27, 0, %s26
    %s29 = ssub.s32 %s16, %s28
    %s30 = ssub.s32 %s17, %s24
    %s31 = sor.u32 %s29, %s30
    %p32 = scmp.eq.s32.totalorder %s31, 0
    %s34 = sadd.s32 %s33, 1
    %s35 = scalar_select %p32, %s33, %s34
    %p38 = pneg %p32
    %p39 = scmp.eq.s32.totalorder %s9, 1
    %p40 = por %p38, %p39
    %p41 = scmp.ne.s32.totalorder %s33, %s36
    %p42 = scmp.eq.s32.totalorder %s9, 0
    %p43 = por %p41, %p42
    %p44 = scmp.ne.s32.totalorder %s33, %s36
    %p45 = scmp.eq.s32.totalorder %s14, 1
    %p46 = por %p44, %p45
    %p47 = scmp.ne.s32.totalorder %s36, %s37
    %p48 = scmp.eq.s32.totalorder %s14, 0
    %p49 = por %p47, %p48
    %p50 = scmp.ne.s32.totalorder %s36, %s37
    %p51 = scmp.eq.s32.totalorder %s15, 1
    %p52 = por %p50, %p51
    %p54 = scmp.ne.s32.totalorder %s37, %s53
    %p55 = scmp.eq.s32.totalorder %s15, 0
    %p56 = por %p54, %p55
    %s58 = sadd.s32 %s57, 1
    %p61 = scmp.eq.s32.totalorder %s9, 1
    %p62 = scmp.ne.s32.totalorder %s57, %s59
    %p63 = scmp.eq.s32.totalorder %s9, 0
    %p64 = por %p62, %p63
    %p65 = scmp.ne.s32.totalorder %s57, %s59
    %p66 = scmp.eq.s32.totalorder %s14, 1
    %p67 = por %p65, %p66
    %p68 = scmp.ne.s32.totalorder %s59, %s60
    %p69 = scmp.eq.s32.totalorder %s14, 0
    %p70 = por %p68, %p69
    %p71 = scmp.ne.s32.totalorder %s59, %s60
    %p72 = scmp.eq.s32.totalorder %s15, 1
    %p73 = por %p71, %p72
    %p75 = scmp.ne.s32.totalorder %s60, %s74
    %p76 = scmp.eq.s32.totalorder %s15, 0
    %p77 = por %p75, %p76
    %s79 = sadd.s32 %s78, 1
    %p82 = scmp.eq.s32.totalorder %s9, 1
    %p83 = scmp.ne.s32.totalorder %s78, %s80
    %p84 = scmp.eq.s32.totalorder %s9, 0
    %p85 = por %p83, %p84
    %p86 = scmp.ne.s32.totalorder %s78, %s80
    %p87 = scmp.eq.s32.totalorder %s14, 1
    %p88 = por %p86, %p87
    %p89 = scmp.ne.s32.totalorder %s80, %s81
    %p90 = scmp.eq.s32.totalorder %s14, 0
    %p91 = por %p89, %p90
    %p92 = scmp.ne.s32.totalorder %s80, %s81
    %p93 = scmp.eq.s32.totalorder %s15, 1
    %p94 = por %p92, %p93
    %p96 = scmp.ne.s32.totalorder %s81, %s95
    %p97 = scmp.eq.s32.totalorder %s15, 0
    %p98 = por %p96, %p97
    %s99 = ssub.s32 %s16, %s28
    %s100 = ssub.s32 %s17, %s24
    %s101 = sor.u32 %s99, %s100
    %p102 = scmp.eq.s32.totalorder %s101, 0
    %s104 = sadd.s32 %s103, 1
    %s105 = scalar_select %p102, %s103, %s104
    %p108 = pneg %p102
    %p109 = scmp.eq.s32.totalorder %s9, 1
    %p110 = por %p108, %p109
    %p111 = scmp.ne.s32.totalorder %s103, %s106
    %p112 = scmp.eq.s32.totalorder %s9, 0
    %p113 = por %p111, %p112
    %p114 = scmp.ne.s32.totalorder %s103, %s106
    %p115 = scmp.eq.s32.totalorder %s14, 1
    %p116 = por %p114, %p115
    %p117 = scmp.ne.s32.totalorder %s106, %s107
    %p118 = scmp.eq.s32.totalorder %s14, 0
    %p119 = por %p117, %p118
    %p120 = scmp.ne.s32.totalorder %s106, %s107
    %p121 = scmp.eq.s32.totalorder %s15, 1
    %p122 = por %p120, %p121
    %p124 = scmp.ne.s32.totalorder %s107, %s123
    %p125 = scmp.eq.s32.totalorder %s15, 0
    %p126 = por %p124, %p125
    %p127 = scmp.le.s32.totalorder 1, %s9
    %p128 = scmp.lt.s32.totalorder %s9, 3
    %p129 = pnand %p127, %p128
    %p130 = pneg %p129
    // Predicated region
    $region9: #{effi_init_block_forward.1} parent=5 // pred_check
      _
    $region10: #{effi_init_block_forward.1} parent=5 // pred_check_branch
      %132 = sbr.rel (%p129) target = $region12
    $region11: #{effi_init_block_forward.1} parent=5 // pred_region
      %s133 = ssub.s32 %s9, 1
      // Predicated region
      $region13: #{effi_init_block_forward.1} parent=11 // pred_check
        %p134 = pneg %p70
      $region14: #{effi_init_block_forward.1} parent=11 // pred_check_branch
        %136 = sbr.rel (%p134) target = $region16
      $region15: #{effi_init_block_forward.1} parent=11 // pred_region
        _
      $region16: #{effi_init_block_forward.1} parent=11 // pred_fallthru
        _
      // Predicated region
      $region17: #{effi_init_block_forward.1} parent=11 // pred_check
        %p137 = pneg %p91
      $region18: #{effi_init_block_forward.1} parent=11 // pred_check_branch
        %139 = sbr.rel (%p137) target = $region20
      $region19: #{effi_init_block_forward.1} parent=11 // pred_region
        _
      $region20: #{effi_init_block_forward.1} parent=11 // pred_fallthru
        _
    $region12: #{effi_init_block_forward.1} parent=5 // pred_fallthru
      _
    %p140 = scmp.lt.s32.totalorder %s9, 2
    // Predicated region
    $region21: #{effi_init_block_forward.1} parent=5 // pred_check
      %p141 = pneg %p140
    $region22: #{effi_init_block_forward.1} parent=5 // pred_check_branch
      %143 = sbr.rel (%p141) target = $region24
    $region23: #{effi_init_block_forward.1} parent=5 // pred_region
      // Predicated region
      $region25: #{effi_init_block_forward.1} parent=23 // pred_check
        %p144 = pneg %p43
      $region26: #{effi_init_block_forward.1} parent=23 // pred_check_branch
        %146 = sbr.rel (%p144) target = $region28
      $region27: #{effi_init_block_forward.1} parent=23 // pred_region
        %p147 = scmp.lt.s32.totalorder %s16, 1
        %s148 = scalar_select %p147, %s16, 1
        %p149 = scmp.lt.s32.totalorder %s17, 0
        %s150 = scalar_select %p149, %s17, 0
        %s151 = smul.addr %s148, 4
        %s152 = sadd.s32 %s150, %s151
        %s153 = smul.addr %s152, 4
        %s154 = scalar_lea.vmem %s0, %s153
      $region28: #{effi_init_block_forward.1} parent=23 // pred_fallthru
        _
    $region24: #{effi_init_block_forward.1} parent=5 // pred_fallthru
      _
    %p155 = scmp.le.s32.totalorder 1, %s9
    %p156 = scmp.lt.s32.totalorder %s9, 3
    %p157 = pnand %p155, %p156
    %p158 = pneg %p157
    // Predicated region
    $region29: #{effi_init_block_forward.1} parent=5 // pred_check
      _
    $region30: #{effi_init_block_forward.1} parent=5 // pred_check_branch
      %160 = sbr.rel (%p157) target = $region32
    $region31: #{effi_init_block_forward.1} parent=5 // pred_region
      %s161 = ssub.s32 %s9, 1
      %p162 = scmp.lt.s32.totalorder %s18, 1
      %s163 = scalar_select %p162, %s18, 1
      %p164 = scmp.lt.s32.totalorder %s19, 0
      %s165 = scalar_select %p164, %s19, 0
      %s166 = smul.addr %s163, 4
      %s167 = sadd.s32 %s165, %s166
      %s168 = smul.addr %s167, 4
      %s169 = scalar_lea.vmem %s0, %s168
      %p170 = pneg %p49
      %p171 = pneg %p46
      %p172 = pneg %p70
      %p173 = pneg %p67
      %p174 = pneg %p91
      %p175 = pneg %p88
      %p176 = pneg %p119
      %p177 = pneg %p116
      %p178 = scmp.lt.s32.totalorder %s18, 1
      %s179 = scalar_select %p178, %s18, 1
      %p180 = scmp.lt.s32.totalorder %s19, 0
      %s181 = scalar_select %p180, %s19, 0
      %s182 = smul.addr %s179, 4
      %s183 = sadd.s32 %s181, %s182
      %s184 = smul.addr %s183, 8
      %s185 = scalar_lea.vmem %s3, %s184
      %p186 = scmp.lt.s32.totalorder %s18, 1
      %s187 = scalar_select %p186, %s18, 1
      %p188 = scmp.lt.s32.totalorder %s19, 0
      %s189 = scalar_select %p188, %s19, 0
      %s190 = smul.addr %s187, 4
      %s191 = sadd.s32 %s189, %s190
      %s192 = smul.addr %s191, 4
      %s193 = scalar_lea.vmem %s0, %s192
      %p194 = scmp.lt.s32.totalorder %s18, 1
      %s195 = scalar_select %p194, %s18, 1
      %p196 = scmp.lt.s32.totalorder %s19, 0
      %s197 = scalar_select %p196, %s19, 0
      %s198 = smul.addr %s195, 4
      %s199 = sadd.s32 %s197, %s198
      %s200 = smul.addr %s199, 8
      %s201 = scalar_lea.vmem %s3, %s200
      %v203 = vld [vmem:[%s1] sm:$0xf]
      %v204 = vld [vmem:[%s1 + $0x4] sm:$0xf]
      %v205 = vld [vmem:[%s1 + $0x8] sm:$0xf]
      %v206 = vld [vmem:[%s1 + $0xc] sm:$0xf]
      %v207 = vld [vmem:[%s193] sm:$0xf]
      %v208 = vld [vmem:[%s193 + $0x4] sm:$0xf]
      %v209 = vld [vmem:[%s193 + $0x8] sm:$0xf]
      %v210 = vld [vmem:[%s193 + $0xc] sm:$0x3]
      %v211 = vld [vmem:[%s2] sm:$0xff]
      %v212 = vld [vmem:[%s2 + $0x8] sm:$0xff]
      %v213 = vld [vmem:[%s2 + $0x10] sm:$0xff]
      %v214 = vld [vmem:[%s2 + $0x18] sm:$0xff]
      %216 = vset.pattern.permute.xlu0 0
      %217 = vperm.xlu0 %216, %v211
      %v218 = vpop.permute.xlu0 %217
      %221 = vset.pattern.permute.xlu0 0
      %222 = vperm.xlu0 %221, %v212
      %v223 = vpop.permute.xlu0 %222
      %226 = vset.pattern.permute.xlu0 0
      %227 = vperm.xlu0 %226, %v213
      %v228 = vpop.permute.xlu0 %227
      %231 = vset.pattern.permute.xlu0 0
      %232 = vperm.xlu0 %231, %v214
      %v233 = vpop.permute.xlu0 %232
      %v239 = vunpack.c.l.b16 %v203
      %v240 = vunpack.c.l.b16 %v204
      %v241 = vunpack.c.l.b16 %v205
      %v242 = vunpack.c.l.b16 %v206
      %v243 = vpack.c.b16 %v240, %v239
      %v244 = vpack.c.b16 %v242, %v241
      %v249 = vunpack.c.l.b16 %v207
      %v250 = vunpack.c.l.b16 %v208
      %v251 = vunpack.c.l.b16 %v209
      %v252 = vunpack.c.l.b16 %v210
      %v253 = vpack.c.b16 %v250, %v249
      %v254 = vpack.c.b16 %v252, %v251
      %vm256 = vcmask 220160
      %v258 = vsel %vm256, %v243, 0
      %v261 = vsel %vm256, %v244, 0
      %vm263 = vcmask 1044480
      %vm264 = vcmask 1045504
      %v265 = vsel %vm263, 4294967295, 65535
      %v266 = vsel %vm264, %v265, 0
      %v268 = vand.u32 %v254, %v266
      %270 = vmatprep.subr.bf16.mxu0 0
      %271 = vmatpush1.bf16.msra.mxu0 %v253
      %272 = vmatprep.subr.bf16.mxu0 0
      %273 = vmatpush1.bf16.msra.mxu0 %v268
      %274 = vmatprep.subr.bf16.mxu0 0
      %275 = vmatpush1.bf16.msra.mxu0 0
      %276 = vmatprep.subr.bf16.mxu0 0
      %277 = vmatpush1.bf16.msra.mxu0 0
      %278 = vmatprep.subr.bf16.mxu0 0
      %279 = vmatpush1.bf16.msra.mxu0 0
      %280 = vmatprep.subr.bf16.mxu0 0
      %281 = vmatpush1.bf16.msra.mxu0 0
      %282 = vmatprep.subr.bf16.mxu0 0
      %283 = vmatpush1.bf16.msra.mxu0 0
      %284 = vmatprep.subr.bf16.mxu0 0
      %285 = vmatpush1.bf16.msra.mxu0 0
      %286 = vmatprep.subr.bf16.mxu0 0
      %287 = vmatpush1.bf16.msra.mxu0 0
      %288 = vmatprep.subr.bf16.mxu0 0
      %289 = vmatpush1.bf16.msra.mxu0 0
      %290 = vmatprep.subr.bf16.mxu0 0
      %291 = vmatpush1.bf16.msra.mxu0 0
      %292 = vmatprep.subr.bf16.mxu0 0
      %293 = vmatpush1.bf16.msra.mxu0 0
      %294 = vmatprep.subr.bf16.mxu0 0
      %295 = vmatpush1.bf16.msra.mxu0 0
      %296 = vmatprep.subr.bf16.mxu0 0
      %297 = vmatpush1.bf16.msra.mxu0 0
      %298 = vmatprep.subr.bf16.mxu0 0
      %299 = vmatpush1.bf16.msra.mxu0 0
      %300 = vmatprep.subr.bf16.mxu0 0
      %301 = vmatpush1.bf16.msra.mxu0 0
      %302 = vmatprep.mubr.bf16.mxu0 0
      %303 = vmatmul.mubr.bf16.gmra.mrb[0].mxu0 %v258
      %v304 = vpop.f32.mrb[0].mxu0
      %v305 = vadd.f32 %v218, %v304
      %v306 = vpop.f32.mrb[0].mxu0
      %v307 = vpop.f32.mrb[0].mxu0
      %v308 = vadd.f32 %v223, %v307
      %v309 = vpop.f32.mrb[0].mxu0
      %310 = vmatprep.mubr.bf16.mxu0 0
      %311 = vmatmul.mubr.bf16.gmra.mrb[0].mxu0 %v261
      %v312 = vpop.f32.mrb[0].mxu0
      %v313 = vadd.f32 %v228, %v312
      %v314 = vpop.f32.mrb[0].mxu0
      %v315 = vpop.f32.mrb[0].mxu0
      %v316 = vadd.f32 %v233, %v315
      %v317 = vpop.f32.mrb[0].mxu0
      %318 = vdwg.mxu0
      %v319 = vmax.f32 %v305, 0.0
      %v320 = vmax.f32 %v308, 0.0
      %v321 = vmax.f32 %v313, 0.0
      %v322 = vmax.f32 %v316, 0.0
      %vm323 = vcmask 523264
      %324 = vst.msk [vmem:[%s201] sm:$0xff] %vm323, %v319
      %325 = vst.msk [vmem:[%s201 + $0x8] sm:$0xff] %vm323, %v320
      %326 = vst.msk [vmem:[%s201 + $0x10] sm:$0xff] %vm323, %v321
      %327 = vst.msk [vmem:[%s201 + $0x18] sm:$0xff] %vm323, %v322
      %p328 = scmp.lt.s32.totalorder %s18, 1
      %s329 = scalar_select %p328, %s18, 1
      %p330 = scmp.lt.s32.totalorder %s19, 0
      %s331 = scalar_select %p330, %s19, 0
      %s332 = smul.addr %s329, 4
      %s333 = sadd.s32 %s331, %s332
      %s334 = smul.addr %s333, 8
      %s335 = scalar_lea.vmem %s3, %s334
      // Predicated region
      $region33: #{effi_init_block_forward.1} parent=31 // pred_check
        %p336 = pneg %p116
      $region34: #{effi_init_block_forward.1} parent=31 // pred_check_branch
        %338 = sbr.rel (%p336) target = $region36
      $region35: #{effi_init_block_forward.1} parent=31 // pred_region
        _
      $region36: #{effi_init_block_forward.1} parent=31 // pred_fallthru
        _
    $region32: #{effi_init_block_forward.1} parent=5 // pred_fallthru
      _
    %p339 = scmp.le.s32.totalorder 2, %s9
    // Predicated region
    $region37: #{effi_init_block_forward.1} parent=5 // pred_check
      %p340 = pneg %p339
    $region38: #{effi_init_block_forward.1} parent=5 // pred_check_branch
      %342 = sbr.rel (%p340) target = $region40
    $region39: #{effi_init_block_forward.1} parent=5 // pred_region
      %s343 = ssub.s32 %s9, 2
      // Predicated region
      $region41: #{effi_init_block_forward.1} parent=39 // pred_check
        %p344 = pneg %p122
      $region42: #{effi_init_block_forward.1} parent=39 // pred_check_branch
        %346 = sbr.rel (%p344) target = $region44
      $region43: #{effi_init_block_forward.1} parent=39 // pred_region
        %p347 = scmp.lt.s32.totalorder %s20, 1
        %s348 = scalar_select %p347, %s20, 1
        %p349 = scmp.lt.s32.totalorder %s21, 0
        %s350 = scalar_select %p349, %s21, 0
        %s351 = smul.addr %s348, 4
        %s352 = sadd.s32 %s350, %s351
        %s353 = smul.addr %s352, 8
        %s354 = scalar_lea.vmem %s3, %s353
      $region44: #{effi_init_block_forward.1} parent=39 // pred_fallthru
        _
    $region40: #{effi_init_block_forward.1} parent=5 // pred_fallthru
      _
  $region6: #{effi_init_block_forward.1} parent=0 // loop_footer
    %s13 = sadd.s32 1, %s9
  $region7: #{effi_init_block_forward.1} parent=0 // loop_footer_branch
    %8 = sbr.rel target = $region3
  $region8: #{effi_init_block_forward.1} parent=0 // loop_exit
    _

</llo_original>
